<compile_context>
chip_gen: v7x
topology: tpu7x:2x2x1
jax: 0.10.0
libtpu: 0.0.40
codegen_flags: <defaults>
</compile_context>

<pallas_src>
import jax
import jax.numpy as jnp
from jax import lax
from jax.experimental import pallas as pl
from jax.experimental.pallas import tpu as pltpu


def _round_up(x, m):
    return ((x + m - 1) // m) * m


def _make_infonce_kernel(blk, n_valid, n_pad, inv_t):
    # All constants are Python numbers so they are baked into the trace as literals
    # (jnp scalars here would be captured constants, which pallas_call rejects).
    neg_big = -1e30
    eps2 = 1e-24          # guard on the *squared* norm ~ (1e-12)^2, like the reference eps

    def kernel(nn_ref, p_ref, loss_ref, q_ref, m_ref, l_ref, d_ref):
        i = pl.program_id(0)
        j = pl.program_id(1)
        last_j = pl.num_programs(1) - 1

        # ---- per-row-tile init (j == 0): normalize queries once, fold 1/T, cast to MXU dtype ----
        @pl.when(j == 0)
        def _():
            q = nn_ref[...].astype(jnp.float32)
            q_ss = jnp.sum(q * q, axis=1, keepdims=True)
            qn = q * (lax.rsqrt(jnp.maximum(q_ss, eps2)) * inv_t)
            q_ref[...] = qn.astype(q_ref.dtype)
            m_ref[...] = jnp.full(m_ref.shape, neg_big, jnp.float32)
            l_ref[...] = jnp.zeros(l_ref.shape, jnp.float32)
            d_ref[...] = jnp.zeros(d_ref.shape, jnp.float32)

        # ---- logits tile on the MXU; contract the feature axis of BOTH operands (no transpose).
        #      Keys arrive pre-normalized (and already in the MXU dtype) from the wrapper. ----
        s = lax.dot_general(q_ref[...], p_ref[...],
                            dimension_numbers=(((1,), (1,)), ((), ())),
                            preferred_element_type=jnp.float32)

        # ---- positive-pair logit = diagonal of this tile at j == i (same precision path as lse) ----
        @pl.when(j == i)
        def _():
            row = lax.broadcasted_iota(jnp.int32, s.shape, 0)
            col = lax.broadcasted_iota(jnp.int32, s.shape, 1)
            d_ref[...] = jnp.sum(jnp.where(row == col, s, 0.0), axis=1, keepdims=True)

        def online_update(s_tile):
            m_new = jnp.maximum(m_ref[...], jnp.max(s_tile, axis=1, keepdims=True))
            l_ref[...] = (jnp.exp(m_ref[...] - m_new) * l_ref[...]
                          + jnp.sum(jnp.exp(s_tile - m_new), axis=1, keepdims=True))
            m_ref[...] = m_new

        if n_valid != n_pad:
            # Only the last key tile can contain padded columns: mask there, nowhere else.
            @pl.when(j != last_j)
            def _():
                online_update(s)

            @pl.when(j == last_j)
            def _():
                col = j * blk + lax.broadcasted_iota(jnp.int32, s.shape, 1)
                online_update(jnp.where(col < n_valid, s, neg_big))
        else:
            online_update(s)

        # ---- finalize: per-row loss = logsumexp(row) - positive logit, lane-dense store ----
        @pl.when(j == last_j)
        def _():
            per_row = m_ref[...] + jnp.log(l_ref[...]) - d_ref[...]      # (blk, 1)
            loss_ref[...] = jnp.broadcast_to(per_row, loss_ref.shape)    # (blk, 128)

    return kernel


def infonce_pallas(nn, p, temperature=0.1, *, block=256, use_bf16=True):
    """InfoNCE forward. Returns a scalar loss (mean cross-entropy vs. diagonal labels)."""
    assert nn.ndim == 2 and nn.shape == p.shape
    n, d = nn.shape

    # TODO(synk): gather_from_all / GatherLayer (cross-device all-gather that keeps gradients)
    # is an identity on a single device; a multi-device version would all-gather nn/p via
    # pltpu.make_async_remote_copy before calling this kernel.

    blk = max(8, _round_up(min(block, _round_up(n, 8)), 8))   # row tile == key tile
    n_pad = _round_up(n, blk)
    d_pad = _round_up(d, 128)
    n_tiles = n_pad // blk

    key_dtype = jnp.bfloat16 if use_bf16 else jnp.float32
    in_bytes = 2 if use_bf16 else 4

    # Queries: f32 in HBM (read once per row tile); pad only when shapes are not aligned.
    nn_p = nn.astype(jnp.float32)
    if (n_pad, d_pad) != (n, d):
        nn_p = jnp.pad(nn_p, ((0, n_pad - n), (0, d_pad - d)))

    # Keys: L2-normalize + cast (+ pad) in one fused XLA pass; bf16 halves the re-read bytes.
    p32 = p.astype(jnp.float32)
    p_n = p32 * lax.rsqrt(jnp.maximum(jnp.sum(p32 * p32, axis=1, keepdims=True), 1e-24))
    p_n = p_n.astype(key_dtype)
    if (n_pad, d_pad) != (n, d):
        p_n = jnp.pad(p_n, ((0, n_pad - n), (0, d_pad - d)))

    kernel = _make_infonce_kernel(blk, n, n_pad, 1.0 / float(temperature))

    # Key tiles are re-fetched once per row tile: account for that in bytes_accessed.
    cost = pl.CostEstimate(
        flops=2 * n_pad * n_pad * d_pad + 6 * n_pad * d_pad,
        transcendentals=n_pad * n_pad + 2 * n_pad,
        bytes_accessed=(n_tiles * n_pad * d_pad * in_bytes    # keys, re-read per row tile
                        + n_pad * d_pad * 4                   # queries, read once
                        + n_pad * 128 * 4),                   # per-row loss slab
    )

    # Explicit VMEM budget: double-buffered q input, N-buffered key input, cached q tile,
    # double-buffered output, per-row stats. Clamped to 64 MiB so v7x cannot be overcommitted.
    key_buffers = 3 if n_tiles >= 3 else 2
    vmem_need = (2 * blk * d_pad * 4
                 + key_buffers * blk * d_pad * in_bytes
                 + blk * d_pad * in_bytes
                 + 2 * blk * 128 * 4
                 + 3 * blk * 128 * 4
                 + (2 << 20))
    vmem_limit = int(min(max(vmem_need, 32 << 20), 64 << 20))

    key_index_map = lambda i, j: (j, 0)
    key_spec_kwargs = {}
    if key_buffers > 2 and hasattr(pl, "Buffered"):
        key_spec_kwargs["pipeline_mode"] = pl.Buffered(key_buffers)
    try:
        key_spec = pl.BlockSpec((blk, d_pad), key_index_map, **key_spec_kwargs)
    except TypeError:   # older jax without pipeline_mode: fall back to default double buffering
        key_spec = pl.BlockSpec((blk, d_pad), key_index_map)

    out = pl.pallas_call(
        kernel,
        out_shape=jax.ShapeDtypeStruct((n_pad, 128), jnp.float32),
        grid_spec=pltpu.PrefetchScalarGridSpec(
            num_scalar_prefetch=0,
            grid=(n_tiles, n_tiles),
            in_specs=[
                pl.BlockSpec((blk, d_pad), lambda i, j: (i, 0)),   # query rows (resident over j)
                key_spec,                                          # key rows (fetched every step)
            ],
            out_specs=pl.BlockSpec((blk, 128), lambda i, j: (i, 0)),
            scratch_shapes=[
                pltpu.VMEM((blk, d_pad), key_dtype),   # normalized * (1/T) query tile, MXU dtype
                pltpu.VMEM((blk, 1), jnp.float32),     # running max m
                pltpu.VMEM((blk, 1), jnp.float32),     # running sum l
                pltpu.VMEM((blk, 1), jnp.float32),     # positive (diagonal) logit
            ],
        ),
        compiler_params=pltpu.CompilerParams(
            dimension_semantics=("parallel", "arbitrary"),
            vmem_limit_bytes=vmem_limit,
        ),
        cost_estimate=cost,
    )(nn_p, p_n)

    # Tiny O(N) epilogue: mean over the n real rows (padded rows are discarded).
    return jnp.sum(out[:n, 0]) / n


def infonce_ref(nn, p, temperature=0.1):
    eps = 1e-12
    nn = nn / jnp.maximum(jnp.linalg.norm(nn, axis=1, keepdims=True), eps)
    p = p / jnp.maximum(jnp.linalg.norm(p, axis=1, keepdims=True), eps)
    logits = (nn @ p.T) / temperature
    n = logits.shape[0]
    lse = jax.scipy.special.logsumexp(logits, axis=1)
    return jnp.mean(lse - logits[jnp.arange(n), jnp.arange(n)])


if __name__ == "__main__":
    key = jax.random.PRNGKey(0)
    k1, k2, k3, k4 = jax.random.split(key, 4)

    # (a) Small f32-MXU path consistent with the module: batch=8 projections of dim 32.
    N, D = 8, 32
    nn_feat = jax.random.normal(k1, (N, D), dtype=jnp.float32)
    p_feat = jax.random.normal(k2, (N, D), dtype=jnp.float32)

    loss_f32 = infonce_pallas(nn_feat, p_feat, temperature=0.1, use_bf16=False)
    jax.block_until_ready(loss_f32)
    ref_f32 = infonce_ref(nn_feat, p_feat, temperature=0.1)
    assert jnp.allclose(loss_f32, ref_f32, atol=1e-4, rtol=1e-4), (loss_f32, ref_f32)

    # (b) Tiled / padded / bf16 / multi-buffered-key path: 4x4 grid, last key tile masked.
    N2, D2 = 200, 96
    nn2 = jax.random.normal(k3, (N2, D2), dtype=jnp.float32)
    p2 = jax.random.normal(k4, (N2, D2), dtype=jnp.float32)

    loss_bf16_tiled = infonce_pallas(nn2, p2, temperature=0.1, use_bf16=True, block=64)
    jax.block_until_ready(loss_bf16_tiled)
    ref2 = infonce_ref(nn2, p2, temperature=0.1)
    assert jnp.allclose(loss_bf16_tiled, ref2, atol=3e-2, rtol=2e-2), (loss_bf16_tiled, ref2)

    # (c) Default configuration (block=256 -> single 200-row tile, bf16 keys, no masking).
    loss_bf16 = infonce_pallas(nn2, p2, temperature=0.1)
    jax.block_until_ready(loss_bf16)
    assert jnp.allclose(loss_bf16, ref2, atol=3e-2, rtol=2e-2), (loss_bf16, ref2)

    print("KERNEL_OK")
</pallas_src>

<mosaic_0001>
module attributes {stable_mosaic.version = 11 : i64} {
  func.func @kernel(%arg0: i32, %arg1: i32, %arg2: memref<8x128xf32, #tpu.memory_space<vmem>>, %arg3: memref<8x128xf32, #tpu.memory_space<vmem>>, %arg4: memref<8x128xf32, #tpu.memory_space<vmem>>, %arg5: memref<8x128xf32, #tpu.memory_space<vmem>>, %arg6: memref<8x1xf32, #tpu.memory_space<vmem>>, %arg7: memref<8x1xf32, #tpu.memory_space<vmem>>, %arg8: memref<8x1xf32, #tpu.memory_space<vmem>>) attributes {dimension_semantics = [#tpu.dimension_semantics<parallel>, #tpu.dimension_semantics<arbitrary>], iteration_bounds = array<i64: 1, 1>, scalar_prefetch = 0 : i64, scratch_operands = 4 : i64, tpu.core_type = #tpu.core_type<tc>, window_params = [{transform_indices = @transform_0, window_bounds = array<i64: 8, 128>}, {transform_indices = @transform_1, window_bounds = array<i64: 8, 128>}, {transform_indices = @transform_2, window_bounds = array<i64: 8, 128>}]} {
    %c0_i32 = arith.constant 0 : i32
    %0 = arith.cmpi eq, %arg1, %c0_i32 : i32
    %1 = arith.extui %0 : i1 to i32
    %c0_i32_0 = arith.constant 0 : i32
    %2 = arith.cmpi ne, %1, %c0_i32_0 : i32
    scf.if %2 {
      %c0_19 = arith.constant 0 : index
      %c0_20 = arith.constant 0 : index
      %29 = vector.load %arg2[%c0_19, %c0_20] : memref<8x128xf32, #tpu.memory_space<vmem>>, vector<8x128xf32>
      %30 = arith.mulf %29, %29 : vector<8x128xf32>
      %cst_21 = arith.constant dense<0.000000e+00> : vector<8xf32>
      %31 = vector.multi_reduction <add>, %30, %cst_21 [1] : vector<8x128xf32> to vector<8xf32>
      %32 = vector.shape_cast %31 : vector<8xf32> to vector<8x1xf32>
      %cst_22 = arith.constant 1.000000e-24 : f32
      %33 = vector.broadcast %cst_22 : f32 to vector<8x1xf32>
      %34 = arith.maximumf %32, %33 : vector<8x1xf32>
      %35 = math.rsqrt %34 : vector<8x1xf32>
      %cst_23 = arith.constant 1.000000e+01 : f32
      %36 = vector.broadcast %cst_23 : f32 to vector<8x1xf32>
      %37 = arith.mulf %35, %36 : vector<8x1xf32>
      %38 = vector.broadcast %37 : vector<8x1xf32> to vector<8x128xf32>
      %39 = arith.mulf %29, %38 : vector<8x128xf32>
      %c0_24 = arith.constant 0 : index
      %c0_25 = arith.constant 0 : index
      %40 = vector.load %arg5[%c0_24, %c0_25] : memref<8x128xf32, #tpu.memory_space<vmem>>, vector<8x128xf32>
      tpu.vector_store %arg5[%c0_24, %c0_25], %39 {strides = array<i32>} : memref<8x128xf32, #tpu.memory_space<vmem>>, vector<8x128xf32>,
      %cst_26 = arith.constant -1.000000e+30 : f32
      %41 = vector.broadcast %cst_26 : f32 to vector<8x1xf32>
      %c0_27 = arith.constant 0 : index
      %c0_28 = arith.constant 0 : index
      %42 = vector.load %arg6[%c0_27, %c0_28] : memref<8x1xf32, #tpu.memory_space<vmem>>, vector<8x1xf32>
      tpu.vector_store %arg6[%c0_27, %c0_28], %41 {strides = array<i32>} : memref<8x1xf32, #tpu.memory_space<vmem>>, vector<8x1xf32>,
      %cst_29 = arith.constant 0.000000e+00 : f32
      %43 = vector.broadcast %cst_29 : f32 to vector<8x1xf32>
      %c0_30 = arith.constant 0 : index
      %c0_31 = arith.constant 0 : index
      %44 = vector.load %arg7[%c0_30, %c0_31] : memref<8x1xf32, #tpu.memory_space<vmem>>, vector<8x1xf32>
      tpu.vector_store %arg7[%c0_30, %c0_31], %43 {strides = array<i32>} : memref<8x1xf32, #tpu.memory_space<vmem>>, vector<8x1xf32>,
      %cst_32 = arith.constant 0.000000e+00 : f32
      %45 = vector.broadcast %cst_32 : f32 to vector<8x1xf32>
      %c0_33 = arith.constant 0 : index
      %c0_34 = arith.constant 0 : index
      %46 = vector.load %arg8[%c0_33, %c0_34] : memref<8x1xf32, #tpu.memory_space<vmem>>, vector<8x1xf32>
      tpu.vector_store %arg8[%c0_33, %c0_34], %45 {strides = array<i32>} : memref<8x1xf32, #tpu.memory_space<vmem>>, vector<8x1xf32>,
    } else {
    }
    %c0 = arith.constant 0 : index
    %c0_1 = arith.constant 0 : index
    %3 = vector.load %arg5[%c0, %c0_1] : memref<8x128xf32, #tpu.memory_space<vmem>>, vector<8x128xf32>
    %c0_2 = arith.constant 0 : index
    %c0_3 = arith.constant 0 : index
    %4 = vector.load %arg3[%c0_2, %c0_3] : memref<8x128xf32, #tpu.memory_space<vmem>>, vector<8x128xf32>
    %cst = arith.constant dense<0.000000e+00> : vector<8x8xf32>
    %5 = tpu.matmul %3, %4, %cst {dimension_numbers = #tpu.dot_dimension_numbers<[1], [1], [0], [0], [0, 0, 1, 0], [], []>} : vector<8x128xf32>, vector<8x128xf32>, vector<8x8xf32> -> vector<8x8xf32>
    %6 = arith.cmpi eq, %arg1, %arg0 : i32
    %7 = arith.extui %6 : i1 to i32
    %c0_i32_4 = arith.constant 0 : i32
    %8 = arith.cmpi ne, %7, %c0_i32_4 : i32
    scf.if %8 {
      %29 = tpu.iota {dimensions = array<i32: 0>} : vector<8x8xi32>
      %30 = tpu.iota {dimensions = array<i32: 1>} : vector<8x8xi32>
      %31 = arith.cmpi eq, %29, %30 : vector<8x8xi32>
      %cst_19 = arith.constant 0.000000e+00 : f32
      %32 = vector.broadcast %cst_19 : f32 to vector<8x8xf32>
      %33 = arith.select %31, %5, %32 : vector<8x8xi1>, vector<8x8xf32>
      %cst_20 = arith.constant dense<0.000000e+00> : vector<8xf32>
      %34 = vector.multi_reduction <add>, %33, %cst_20 [1] : vector<8x8xf32> to vector<8xf32>
      %35 = vector.shape_cast %34 : vector<8xf32> to vector<8x1xf32>
      %c0_21 = arith.constant 0 : index
      %c0_22 = arith.constant 0 : index
      %36 = vector.load %arg8[%c0_21, %c0_22] : memref<8x1xf32, #tpu.memory_space<vmem>>, vector<8x1xf32>
      tpu.vector_store %arg8[%c0_21, %c0_22], %35 {strides = array<i32>} : memref<8x1xf32, #tpu.memory_space<vmem>>, vector<8x1xf32>,
    } else {
    }
    %c0_5 = arith.constant 0 : index
    %c0_6 = arith.constant 0 : index
    %9 = vector.load %arg6[%c0_5, %c0_6] : memref<8x1xf32, #tpu.memory_space<vmem>>, vector<8x1xf32>
    %cst_7 = arith.constant dense<0xFF800000> : vector<8xf32>
    %10 = vector.multi_reduction <maximumf>, %5, %cst_7 [1] : vector<8x8xf32> to vector<8xf32>
    %11 = vector.shape_cast %10 : vector<8xf32> to vector<8x1xf32>
    %12 = arith.maximumf %9, %11 : vector<8x1xf32>
    %c0_8 = arith.constant 0 : index
    %c0_9 = arith.constant 0 : index
    %13 = vector.load %arg6[%c0_8, %c0_9] : memref<8x1xf32, #tpu.memory_space<vmem>>, vector<8x1xf32>
    %14 = arith.subf %13, %12 : vector<8x1xf32>
    %15 = math.exp %14 : vector<8x1xf32>
    %c0_10 = arith.constant 0 : index
    %c0_11 = arith.constant 0 : index
    %16 = vector.load %arg7[%c0_10, %c0_11] : memref<8x1xf32, #tpu.memory_space<vmem>>, vector<8x1xf32>
    %17 = arith.mulf %15, %16 : vector<8x1xf32>
    %18 = vector.broadcast %12 : vector<8x1xf32> to vector<8x8xf32>
    %19 = arith.subf %5, %18 : vector<8x8xf32>
    %20 = math.exp %19 : vector<8x8xf32>
    %cst_12 = arith.constant dense<0.000000e+00> : vector<8xf32>
    %21 = vector.multi_reduction <add>, %20, %cst_12 [1] : vector<8x8xf32> to vector<8xf32>
    %22 = vector.shape_cast %21 : vector<8xf32> to vector<8x1xf32>
    %23 = arith.addf %17, %22 : vector<8x1xf32>
    %c0_13 = arith.constant 0 : index
    %c0_14 = arith.constant 0 : index
    %24 = vector.load %arg7[%c0_13, %c0_14] : memref<8x1xf32, #tpu.memory_space<vmem>>, vector<8x1xf32>
    tpu.vector_store %arg7[%c0_13, %c0_14], %23 {strides = array<i32>} : memref<8x1xf32, #tpu.memory_space<vmem>>, vector<8x1xf32>,
    %c0_15 = arith.constant 0 : index
    %c0_16 = arith.constant 0 : index
    %25 = vector.load %arg6[%c0_15, %c0_16] : memref<8x1xf32, #tpu.memory_space<vmem>>, vector<8x1xf32>
    tpu.vector_store %arg6[%c0_15, %c0_16], %12 {strides = array<i32>} : memref<8x1xf32, #tpu.memory_space<vmem>>, vector<8x1xf32>,
    %c0_i32_17 = arith.constant 0 : i32
    %26 = arith.cmpi eq, %arg1, %c0_i32_17 : i32
    %27 = arith.extui %26 : i1 to i32
    %c0_i32_18 = arith.constant 0 : i32
    %28 = arith.cmpi ne, %27, %c0_i32_18 : i32
    scf.if %28 {
      %c0_19 = arith.constant 0 : index
      %c0_20 = arith.constant 0 : index
      %29 = vector.load %arg6[%c0_19, %c0_20] : memref<8x1xf32, #tpu.memory_space<vmem>>, vector<8x1xf32>
      %c0_21 = arith.constant 0 : index
      %c0_22 = arith.constant 0 : index
      %30 = vector.load %arg7[%c0_21, %c0_22] : memref<8x1xf32, #tpu.memory_space<vmem>>, vector<8x1xf32>
      %31 = math.log %30 : vector<8x1xf32>
      %32 = arith.addf %29, %31 : vector<8x1xf32>
      %c0_23 = arith.constant 0 : index
      %c0_24 = arith.constant 0 : index
      %33 = vector.load %arg8[%c0_23, %c0_24] : memref<8x1xf32, #tpu.memory_space<vmem>>, vector<8x1xf32>
      %34 = arith.subf %32, %33 : vector<8x1xf32>
      %35 = vector.shape_cast %34 : vector<8x1xf32> to vector<8x1xf32>
      %36 = vector.broadcast %35 : vector<8x1xf32> to vector<8x128xf32>
      %c0_25 = arith.constant 0 : index
      %c0_26 = arith.constant 0 : index
      %37 = vector.load %arg4[%c0_25, %c0_26] : memref<8x128xf32, #tpu.memory_space<vmem>>, vector<8x128xf32>
      tpu.vector_store %arg4[%c0_25, %c0_26], %36 {strides = array<i32>} : memref<8x128xf32, #tpu.memory_space<vmem>>, vector<8x128xf32>,
    } else {
    }
    return
  }
  func.func @transform_0(%arg0: i32, %arg1: i32) -> (i32, i32) {
    %c0_i32 = arith.constant 0 : i32
    %c0_i32_0 = arith.constant 0 : i32
    return %arg0, %c0_i32 : i32, i32
  }
  func.func @transform_1(%arg0: i32, %arg1: i32) -> (i32, i32) {
    %c0_i32 = arith.constant 0 : i32
    %c0_i32_0 = arith.constant 0 : i32
    return %arg1, %c0_i32 : i32, i32
  }
  func.func @transform_2(%arg0: i32, %arg1: i32) -> (i32, i32) {
    %c0_i32 = arith.constant 0 : i32
    %c0_i32_0 = arith.constant 0 : i32
    return %arg0, %c0_i32 : i32, i32
  }
}

</mosaic_0001>

<llo_original>
// kernel: tpu_custom_call.1
$region0: #{tpu_custom_call.1}
  #allocation0 [shape = 'u32[]', space=smem, size = 0x4, offset = 0x4, fixed_abs, tag = 'smem constant byte address 0x4 - core index']
  #allocation1 [shape = 'u32[144,128]{1,0:T(1,128)}', space=vmem, size = 0x12000, scoped, tag = 'internal scratch']
  #allocation2 [shape = 'f32[8,128]{1,0:T(8,128)}', space=vmem, size = 0x1000, scoped, tag = 'scratch operand']
  #allocation3 [shape = 'f32[8,1]{1,0:T(8,128)}', space=vmem, size = 0x1000, scoped, tag = 'scratch operand']
  #allocation4 [shape = 'f32[8,1]{1,0:T(8,128)}', space=vmem, size = 0x1000, scoped, tag = 'scratch operand']
  #allocation5 [shape = 'f32[8,1]{1,0:T(8,128)}', space=vmem, size = 0x1000, scoped, tag = 'scratch operand']
  %s0 = inlined_call_operand.hbm [shape: f32[8,128], index: 0, kind: input, shape index: {}]
  %s1 = inlined_call_operand.hbm [shape: f32[8,128], index: 1, kind: input, shape index: {}]
  %s2 = inlined_call_operand.hbm [shape: f32[8,128], index: 2, kind: output, shape index: {}]
  %s3 = sld [smem:[#allocation0]]
  $region38: #{tpu_custom_call.1} parent=0
    _
  %s5 = ssub.s32 1, %s3
  %s6 = scalar_select 0, %s5, %s3
  $region1: #{tpu_custom_call.1} parent=0
    #allocation6 [shape = 'u8[4096]{0}', space=vmem, size = 0x1000, scoped, tag = 'input window, operand 0, single buffered']
    #allocation7 [shape = 's32[1]{0}', space=sflag, size = 0x4, scoped, tag = 'scoped memory for tpu_custom_call.1']
    #allocation8 [shape = 's32[1]{0}', space=sflag, size = 0x4, scoped, tag = 'scoped memory for tpu_custom_call.1']
    #allocation9 [shape = 'u8[4096]{0}', space=vmem, size = 0x1000, scoped, tag = 'input window, operand 1, single buffered']
    #allocation10 [shape = 's32[1]{0}', space=sflag, size = 0x4, scoped, tag = 'scoped memory for tpu_custom_call.1']
    #allocation11 [shape = 'u8[4096]{0}', space=vmem, size = 0x1000, scoped, tag = 'output window, operand 0, single buffered']
    %7 = vsyncpa [#allocation7], 0
    %8 = vsyncpa [#allocation10], 0
    %9 = vsyncpa [#allocation8], 0
    // Predicated region
    $region2: #{tpu_custom_call.1} parent=1 // pred_check
      _
    $region3: #{tpu_custom_call.1} parent=1 // pred_check_branch
      %11 = sbr.rel (0) target = $region5
    $region4: #{tpu_custom_call.1} parent=1 // pred_region
      %s13 = ssub.s32 128, 128
      %14 = vsyncadd [#allocation7], %s13
      %s16 = sshll.u32 [#allocation6], 4
      %s17 = int_to_ptr.vmem [resolvable:$true] %s16
      %19 = dma.hbm_to_vmem [thread:$0]  %s0, 128, %s17, [#allocation7]
    $region5: #{tpu_custom_call.1} parent=1 // pred_fallthru
      _
    // Predicated region
    $region6: #{tpu_custom_call.1} parent=1 // pred_check
      _
    $region7: #{tpu_custom_call.1} parent=1 // pred_check_branch
      %21 = sbr.rel (0) target = $region9
    $region8: #{tpu_custom_call.1} parent=1 // pred_region
      %s23 = ssub.s32 128, 128
      %24 = vsyncadd [#allocation10], %s23
      %s26 = sshll.u32 [#allocation9], 4
      %s27 = int_to_ptr.vmem [resolvable:$true] %s26
      %29 = dma.hbm_to_vmem [thread:$0]  %s1, 128, %s27, [#allocation10]
    $region9: #{tpu_custom_call.1} parent=1 // pred_fallthru
      _
    // Predicated region
    $region10: #{tpu_custom_call.1} parent=1 // pred_check
      _
    $region11: #{tpu_custom_call.1} parent=1 // pred_check_branch
      %31 = sbr.rel (0) target = $region13
    $region12: #{tpu_custom_call.1} parent=1 // pred_region
      %32 = dma.done [#allocation7], 128
    $region13: #{tpu_custom_call.1} parent=1 // pred_fallthru
      _
    // Predicated region
    $region14: #{tpu_custom_call.1} parent=1 // pred_check
      _
    $region15: #{tpu_custom_call.1} parent=1 // pred_check_branch
      %34 = sbr.rel (0) target = $region17
    $region16: #{tpu_custom_call.1} parent=1 // pred_region
      %35 = dma.done [#allocation10], 128
    $region17: #{tpu_custom_call.1} parent=1 // pred_fallthru
      _
    %p36 = scmp.eq.s32.totalorder 0, 0
    // Predicated region
    $region18: #{tpu_custom_call.1} parent=1 // pred_check
      %p37 = pneg %p36
    $region19: #{tpu_custom_call.1} parent=1 // pred_check_branch
      %39 = sbr.rel (%p37) target = $region21
    $region20: #{tpu_custom_call.1} parent=1 // pred_region
      %v40 = vld [vmem:[#allocation6] sm:$0xff]
      %v41 = vmul.f32 %v40, %v40
      %42 = vadd.xlane.f32.xlu0 %v41
      %v43 = vpop.xlane.xlu0 %42
      %v44 = vmax.f32 %v43, 1e-24
      %v45 = vrsqrt.pop %v44
      %v46 = vmul.f32 %v45, 10.0
      %v47 = vmul.f32 %v40, %v46
      %48 = vst [vmem:[#allocation2] sm:$0xff] %v47
      %vm49 = vcmask 7168
      %50 = vst.msk [vmem:[#allocation3] sm:$0xff] %vm49, -1e+30
      %51 = vst.msk [vmem:[#allocation4] sm:$0xff] %vm49, 0.0
      %52 = vst.msk [vmem:[#allocation5] sm:$0xff] %vm49, 0.0
    $region21: #{tpu_custom_call.1} parent=1 // pred_fallthru
      _
    %v53 = vld [vmem:[#allocation2] sm:$0xff]
    %v54 = vld [vmem:[#allocation9] sm:$0xff]
    %55 = vmatprep.subr.mxu0 0.0
    %56 = vmatpush1.xpose.msra.mxu0 %v54
    %57 = vmatprep.subr.mxu0 0.0
    %58 = vmatpush1.xpose.msra.mxu0 0.0
    %59 = vmatprep.subr.mxu0 0.0
    %60 = vmatpush1.xpose.msra.mxu0 0.0
    %61 = vmatprep.subr.mxu0 0.0
    %62 = vmatpush1.xpose.msra.mxu0 0.0
    %63 = vmatprep.subr.mxu0 0.0
    %64 = vmatpush1.xpose.msra.mxu0 0.0
    %65 = vmatprep.subr.mxu0 0.0
    %66 = vmatpush1.xpose.msra.mxu0 0.0
    %67 = vmatprep.subr.mxu0 0.0
    %68 = vmatpush1.xpose.msra.mxu0 0.0
    %69 = vmatprep.subr.mxu0 0.0
    %70 = vmatpush1.xpose.msra.mxu0 0.0
    %71 = vmatprep.subr.mxu0 0.0
    %72 = vmatpush1.xpose.msra.mxu0 0.0
    %73 = vmatprep.subr.mxu0 0.0
    %74 = vmatpush1.xpose.msra.mxu0 0.0
    %75 = vmatprep.subr.mxu0 0.0
    %76 = vmatpush1.xpose.msra.mxu0 0.0
    %77 = vmatprep.subr.mxu0 0.0
    %78 = vmatpush1.xpose.msra.mxu0 0.0
    %79 = vmatprep.subr.mxu0 0.0
    %80 = vmatpush1.xpose.msra.mxu0 0.0
    %81 = vmatprep.subr.mxu0 0.0
    %82 = vmatpush1.xpose.msra.mxu0 0.0
    %83 = vmatprep.subr.mxu0 0.0
    %84 = vmatpush1.xpose.msra.mxu0 0.0
    %85 = vmatprep.subr.mxu0 0.0
    %86 = vmatpush1.xpose.msra.mxu0 0.0
    %87 = vmatprep.subr.mxu0 0.0
    %88 = vmatpush1.xpose.msra.mxu0 0.0
    %89 = vmatprep.subr.mxu0 0.0
    %90 = vmatpush1.xpose.msra.mxu0 0.0
    %91 = vmatprep.subr.mxu0 0.0
    %92 = vmatpush1.xpose.msra.mxu0 0.0
    %93 = vmatprep.subr.mxu0 0.0
    %94 = vmatpush1.xpose.msra.mxu0 0.0
    %95 = vmatprep.subr.mxu0 0.0
    %96 = vmatpush1.xpose.msra.mxu0 0.0
    %97 = vmatprep.subr.mxu0 0.0
    %98 = vmatpush1.xpose.msra.mxu0 0.0
    %99 = vmatprep.subr.mxu0 0.0
    %100 = vmatpush1.xpose.msra.mxu0 0.0
    %101 = vmatprep.subr.mxu0 0.0
    %102 = vmatpush1.xpose.msra.mxu0 0.0
    %103 = vmatprep.subr.mxu0 0.0
    %104 = vmatpush1.xpose.msra.mxu0 0.0
    %105 = vmatprep.subr.mxu0 0.0
    %106 = vmatpush1.xpose.msra.mxu0 0.0
    %107 = vmatprep.subr.mxu0 0.0
    %108 = vmatpush1.xpose.msra.mxu0 0.0
    %109 = vmatprep.subr.mxu0 0.0
    %110 = vmatpush1.xpose.msra.mxu0 0.0
    %111 = vmatprep.subr.mxu0 0.0
    %112 = vmatpush1.xpose.msra.mxu0 0.0
    %113 = vmatprep.subr.mxu0 0.0
    %114 = vmatpush1.xpose.msra.mxu0 0.0
    %115 = vmatprep.subr.mxu0 0.0
    %116 = vmatpush1.xpose.msra.mxu0 0.0
    %117 = vmatprep.subr.mxu0 0.0
    %118 = vmatpush1.xpose.msra.mxu0 0.0
    %119 = vmatprep.mubr.f32.mxu0 0.0
    %120 = vmatmul.mubr.f32.gmra.mrb[0].mxu0 %v53
    %v121 = vpop.f32.mrb[0].mxu0
    %v122 = vadd.f32 0.0, %v121
    %v123 = vpop.f32.mrb[0].mxu0
    %124 = vdwg.mxu0
    %p125 = scmp.eq.s32.totalorder 0, 0
    // Predicated region
    $region22: #{tpu_custom_call.1} parent=1 // pred_check
      %p126 = pneg %p125
    $region23: #{tpu_custom_call.1} parent=1 // pred_check_branch
      %128 = sbr.rel (%p126) target = $region25
    $region24: #{tpu_custom_call.1} parent=1 // pred_region
      %v129 = vlaneseq
      %v130 = vshrl.u32 %v129, 7
      %v131 = vlaneseq
      %v132 = vand.u32 %v131, 127
      %vm133 = vcmp.eq.s32.totalorder %v130, %v132
      %v134 = vsel %vm133, %v122, 0.0
      %vm135 = vcmask 64512
      %v136 = vsel %vm135, %v134, 0.0
      %137 = vadd.xlane.f32.xlu0 %v136
      %v138 = vpop.xlane.xlu0 %137
      %vm139 = vcmask 7168
      %140 = vst.msk [vmem:[#allocation5] sm:$0xff] %vm139, %v138
    $region25: #{tpu_custom_call.1} parent=1 // pred_fallthru
      _
    %v141 = vld [vmem:[#allocation3] sm:$0xff]
    %vm142 = vcmask 64512
    %v143 = vsel %vm142, %v122, -inf
    %144 = vmax.xlane.f32.xlu0 %v143
    %v145 = vpop.xlane.xlu0 %144
    %v146 = vmax.f32 %v141, %v145
    %v147 = vsub.f32 %v141, %v146
    %v148 = vmul.f32 %v147, 1.442695
    %v149 = vpow.pop %v148
    %v150 = vld [vmem:[#allocation4] sm:$0xff]
    %v151 = vmul.f32 %v149, %v150
    %153 = vset.pattern.permute.xlu0 0
    %154 = vperm.xlu0 %153, %v146
    %v155 = vpop.permute.xlu0 %154
    %v157 = vsub.f32 %v122, %v155
    %v158 = vmul.f32 %v157, 1.442695
    %v159 = vpow.pop %v158
    %v160 = vsel %vm142, %v159, 0.0
    %161 = vadd.xlane.f32.xlu0 %v160
    %v162 = vpop.xlane.xlu0 %161
    %v163 = vadd.f32 %v151, %v162
    %vm164 = vcmask 7168
    %165 = vst.msk [vmem:[#allocation4] sm:$0xff] %vm164, %v163
    %166 = vst.msk [vmem:[#allocation3] sm:$0xff] %vm164, %v146
    // Predicated region
    $region26: #{tpu_custom_call.1} parent=1 // pred_check
      %p167 = pneg %p36
    $region27: #{tpu_custom_call.1} parent=1 // pred_check_branch
      %169 = sbr.rel (%p167) target = $region29
    $region28: #{tpu_custom_call.1} parent=1 // pred_region
      %v170 = vld [vmem:[#allocation3] sm:$0xff]
      %v171 = vld [vmem:[#allocation4] sm:$0xff]
      %v172 = vlog2.pop %v171
      %v173 = vmul.f32 %v172, 0.6931472
      %v174 = vadd.f32 %v170, %v173
      %v175 = vld [vmem:[#allocation5] sm:$0xff]
      %v176 = vsub.f32 %v174, %v175
      %178 = vset.pattern.permute.xlu0 0
      %179 = vperm.xlu0 %178, %v176
      %v180 = vpop.permute.xlu0 %179
      %182 = vst [vmem:[#allocation11] sm:$0xff] %v180
    $region29: #{tpu_custom_call.1} parent=1 // pred_fallthru
      _
    // Predicated region
    $region30: #{tpu_custom_call.1} parent=1 // pred_check
      _
    $region31: #{tpu_custom_call.1} parent=1 // pred_check_branch
      %184 = sbr.rel (0) target = $region33
    $region32: #{tpu_custom_call.1} parent=1 // pred_region
      %s186 = ssub.s32 128, 128
      %187 = vsyncadd [#allocation8], %s186
      %s189 = sshll.u32 [#allocation11], 4
      %s190 = int_to_ptr.vmem [resolvable:$true] %s189
      %192 = dma.vmem_to_hbm [thread:$0]  %s190, 128, %s2, [#allocation8]
    $region33: #{tpu_custom_call.1} parent=1 // pred_fallthru
      _
    // Predicated region
    $region34: #{tpu_custom_call.1} parent=1 // pred_check
      _
    $region35: #{tpu_custom_call.1} parent=1 // pred_check_branch
      %194 = sbr.rel (0) target = $region37
    $region36: #{tpu_custom_call.1} parent=1 // pred_region
      %195 = dma.done [#allocation8], 128
    $region37: #{tpu_custom_call.1} parent=1 // pred_fallthru
      _
    %196 = vsyncpa [#allocation7], 1
    %197 = vsyncpa [#allocation10], 1
    %198 = vsyncpa [#allocation8], 1

</llo_original>
